<compile_context>
chip_gen: v7x
topology: tpu7x:2x2x1
jax: 0.10.0
libtpu: 0.0.40
codegen_flags: <defaults>
</compile_context>

<pallas_src>
import math

import jax
import jax.numpy as jnp
from jax.experimental import pallas as pl
from jax.experimental.pallas import tpu as pltpu


def _round_up(x, m):
    return ((x + m - 1) // m) * m


def _pick_tile(padded_dim, granule, cap):
    """Largest tile = granule * d with d | (padded_dim // granule), tile <= cap.

    padded_dim is already a multiple of granule, so the returned tile divides
    it exactly: no full-tile padding waste, no partial (masked) edge blocks.
    """
    q = padded_dim // granule
    max_d = max(1, min(q, cap // granule))
    for d in range(max_d, 0, -1):
        if q % d == 0:
            return granule * d
    return granule


# ----------------------------- kernels ------------------------------------ #

def _linear_kernel_f32_out(x_ref, w_ref, b_ref, o_ref):
    """f32 output: accumulate directly into the resident output block."""
    k = pl.program_id(2)

    @pl.when(k == 0)
    def _init():
        o_ref[...] = jnp.zeros_like(o_ref)

    o_ref[...] += jnp.dot(x_ref[...], w_ref[...],
                          preferred_element_type=jnp.float32)

    @pl.when(k == pl.num_programs(2) - 1)
    def _finalize():
        o_ref[...] += b_ref[...]          # (1, tn) broadcast over rows


def _linear_kernel_scratch(x_ref, w_ref, b_ref, o_ref, acc_ref):
    """Low-precision output: f32 VMEM accumulator, cast in the epilogue."""
    k = pl.program_id(2)

    @pl.when(k == 0)
    def _init():
        acc_ref[...] = jnp.zeros_like(acc_ref)

    acc_ref[...] += jnp.dot(x_ref[...], w_ref[...],
                            preferred_element_type=jnp.float32)

    @pl.when(k == pl.num_programs(2) - 1)
    def _finalize():
        o_ref[...] = (acc_ref[...] + b_ref[...]).astype(o_ref.dtype)


# ----------------------------- wrapper ------------------------------------- #

def make_my_linear(weight, bias=None, *,
                   use_bf16_mxu=True,
                   tm_max=512, tn_max=512, tk_max=1024,
                   buffer_count=2,
                   fast_path_flops=1 << 21):
    """Build a MyLinear forward.  Weight/bias are padded & cast once here.

    weight: [K, N], bias: [N] or None.  Returned callable maps x:[M,K]->[M,N].
    """
    K, N = weight.shape
    has_bias = bias is not None

    mxu_dtype = jnp.bfloat16 if use_bf16_mxu else weight.dtype
    m_granule = 16 if mxu_dtype == jnp.bfloat16 else 8

    # Pad K / N only to the lane granule; tiles divide the padded dims exactly.
    Kp = _round_up(K, 128)
    Np = _round_up(N, 128)
    tk = _pick_tile(Kp, 128, tk_max)
    tn_base = _pick_tile(Np, 128, tn_max)

    # Prepared (padded + cast) parameters -- done once, not per call.
    wp = jnp.zeros((Kp, Np), mxu_dtype).at[:K, :N].set(weight.astype(mxu_dtype))
    b_f32 = (bias.astype(jnp.float32) if has_bias
             else jnp.zeros((N,), jnp.float32))
    bp = jnp.zeros((1, Np), jnp.float32).at[0, :N].set(b_f32)

    def apply(x, *, force_pallas=False):
        M, Kx = x.shape
        assert Kx == K, (Kx, K)
        out_dtype = x.dtype

        # Tiny-shape fast path: a standalone kernel is launch/DMA dominated
        # for the small GIN layers; XLA's fused dot is strictly faster there.
        if (not force_pallas) and 2 * M * N * K < fast_path_flops:
            out = jnp.dot(x, weight.astype(x.dtype))
            if has_bias:
                out = out + b_f32.astype(out.dtype)
            return out

        Mp = _round_up(M, m_granule)
        tm = _pick_tile(Mp, m_granule, tm_max)
        tn = tn_base

        # Keep >= 2 parallel grid steps where possible so both v7x
        # TensorCores get work (harmless on single-TC v5e/v6e).
        if (Mp // tm) * (Np // tn) < 2:
            if tn % 256 == 0:
                tn //= 2
            elif tm % (2 * m_granule) == 0:
                tm //= 2

        xp = x
        if (Mp != M) or (Kp != K) or (x.dtype != mxu_dtype):
            xp = jnp.zeros((Mp, Kp), mxu_dtype).at[:M, :K].set(
                x.astype(mxu_dtype))

        gm, gn, gk = Mp // tm, Np // tn, Kp // tk
        grid = (gm, gn, gk)

        isz = jnp.dtype(mxu_dtype).itemsize
        osz = jnp.dtype(out_dtype).itemsize
        # Under this grid order x is re-read gn times, W gm times.
        cost = pl.CostEstimate(
            flops=2 * Mp * Np * Kp,
            transcendentals=0,
            bytes_accessed=int(Mp * Kp * isz * gn + Kp * Np * isz * gm
                               + Np * 4 * gm * gn + Mp * Np * osz),
        )

        # Double-buffered working set: x, W, out tiles (+ acc for bf16 out).
        acc_bytes = 0 if out_dtype == jnp.float32 else tm * tn * 4
        ws = (2 * (tm * tk + tk * tn) * isz
              + 2 * tm * tn * osz + acc_bytes + 2 * tn * 4)
        vmem_limit = int(min(max(2 * ws + (4 << 20), 16 << 20), 40 << 20))

        pipeline_mode = (pl.Buffered(buffer_count)
                         if buffer_count != 2 else None)

        def _spec(shape, index_map):
            if pipeline_mode is None:
                return pl.BlockSpec(shape, index_map)
            return pl.BlockSpec(shape, index_map, pipeline_mode=pipeline_mode)

        in_specs = [
            _spec((tm, tk), lambda i, j, k: (i, k)),
            _spec((tk, tn), lambda i, j, k: (k, j)),
            pl.BlockSpec((1, tn), lambda i, j, k: (0, j)),
        ]
        out_spec = pl.BlockSpec((tm, tn), lambda i, j, k: (i, j))

        if out_dtype == jnp.float32:
            kernel = _linear_kernel_f32_out
            scratch_shapes = []
        else:
            kernel = _linear_kernel_scratch
            scratch_shapes = [pltpu.VMEM((tm, tn), jnp.float32)]

        out_p = pl.pallas_call(
            kernel,
            out_shape=jax.ShapeDtypeStruct((Mp, Np), out_dtype),
            grid_spec=pltpu.PrefetchScalarGridSpec(
                num_scalar_prefetch=0,
                grid=grid,
                in_specs=in_specs,
                out_specs=out_spec,
                scratch_shapes=scratch_shapes,
            ),
            compiler_params=pltpu.CompilerParams(
                dimension_semantics=("parallel", "parallel", "arbitrary"),
                vmem_limit_bytes=vmem_limit,
            ),
            cost_estimate=cost,
        )(xp, wp, bp)

        if Mp != M or Np != N:
            out_p = out_p[:M, :N]
        return out_p

    return apply


def my_linear(x, weight, bias=None, **kwargs):
    """One-shot convenience wrapper (re-prepares W/b every call; prefer
    make_my_linear(...) in hot loops)."""
    return make_my_linear(weight, bias, **kwargs)(x)


def init_params(key, in_features, out_features):
    """Matches MyLinear.reset_parameters:
    stdv = 1/sqrt(weight.T.size(1)) = 1/sqrt(in_features); uniform(-stdv, stdv)."""
    stdv = 1.0 / math.sqrt(in_features)
    kw, kb = jax.random.split(key)
    weight = jax.random.uniform(
        kw, (in_features, out_features), jnp.float32, minval=-stdv, maxval=stdv)
    bias = jax.random.uniform(
        kb, (out_features,), jnp.float32, minval=-stdv, maxval=stdv)
    return weight, bias


if __name__ == "__main__":
    key = jax.random.PRNGKey(0)
    k_x1, k_p1, k_x2, k_p2 = jax.random.split(key, 4)

    # --- Case 1: GIN-typical tiny linear ---
    M1, K1, N1 = 8, 32, 64
    x1 = jax.random.normal(k_x1, (M1, K1), jnp.float32)
    w1, b1 = init_params(k_p1, K1, N1)
    ref1 = x1 @ w1 + b1

    # (a) default config -> fast path (exact)
    lin1 = make_my_linear(w1, b1)
    out1a = jax.block_until_ready(lin1(x1))
    assert out1a.shape == (M1, N1)
    assert jnp.allclose(out1a, ref1, atol=1e-5, rtol=1e-5), "mismatch (fast path)"

    # (b) f32 MXU, forced through the Pallas kernel (exercises padding path)
    lin1_f32 = make_my_linear(w1, b1, use_bf16_mxu=False)
    out1b = jax.block_until_ready(lin1_f32(x1, force_pallas=True))
    assert jnp.allclose(out1b, ref1, atol=1e-5, rtol=1e-5), "mismatch (small f32 pallas)"

    # (c) no-bias variant
    lin1_nb = make_my_linear(w1, None, use_bf16_mxu=False)
    out1c = jax.block_until_ready(lin1_nb(x1, force_pallas=True))
    assert jnp.allclose(out1c, x1 @ w1, atol=1e-5, rtol=1e-5), "mismatch (no bias)"

    # --- Case 2: larger shape exercising the (M, N, K) tiling / K reduction ---
    M2, K2, N2 = 512, 1024, 384
    x2 = jax.random.normal(k_x2, (M2, K2), jnp.float32)
    w2, b2 = init_params(k_p2, K2, N2)
    ref2 = x2 @ w2 + b2

    # (a) f32 MXU inputs, tight tolerance
    lin2_f32 = make_my_linear(w2, b2, use_bf16_mxu=False)
    out2a = jax.block_until_ready(lin2_f32(x2))
    assert out2a.shape == (M2, N2)
    assert jnp.allclose(out2a, ref2, atol=1e-4, rtol=1e-4), "mismatch (tiled f32)"

    # (b) default bf16 MXU inputs (f32 accumulation), looser tolerance
    lin2_bf16 = make_my_linear(w2, b2)
    out2b = jax.block_until_ready(lin2_bf16(x2))
    assert jnp.allclose(out2b, ref2, atol=5e-2, rtol=5e-2), "mismatch (bf16 MXU)"

    print("KERNEL_OK")
</pallas_src>

<mosaic_0001>
module attributes {stable_mosaic.version = 11 : i64} {
  func.func @_linear_kernel_f32_out(%arg0: i32, %arg1: i32, %arg2: i32, %arg3: memref<8x128xf32, #tpu.memory_space<vmem>>, %arg4: memref<128x128xf32, #tpu.memory_space<vmem>>, %arg5: memref<1x128xf32, #tpu.memory_space<vmem>>, %arg6: memref<8x128xf32, #tpu.memory_space<vmem>>) attributes {dimension_semantics = [#tpu.dimension_semantics<parallel>, #tpu.dimension_semantics<parallel>, #tpu.dimension_semantics<arbitrary>], iteration_bounds = array<i64: 1, 1, 1>, scalar_prefetch = 0 : i64, scratch_operands = 0 : i64, tpu.core_type = #tpu.core_type<tc>, window_params = [{transform_indices = @transform_0, window_bounds = array<i64: 8, 128>}, {transform_indices = @transform_1, window_bounds = array<i64: 128, 128>}, {transform_indices = @transform_2, window_bounds = array<i64: 1, 128>}, {transform_indices = @transform_3, window_bounds = array<i64: 8, 128>}]} {
    %c0_i32 = arith.constant 0 : i32
    %0 = arith.cmpi eq, %arg2, %c0_i32 : i32
    %1 = arith.extui %0 : i1 to i32
    %c0_i32_0 = arith.constant 0 : i32
    %2 = arith.cmpi ne, %1, %c0_i32_0 : i32
    scf.if %2 {
      %cst_10 = arith.constant 0.000000e+00 : f32
      %12 = vector.broadcast %cst_10 : f32 to vector<8x128xf32>
      %c0_11 = arith.constant 0 : index
      %c0_12 = arith.constant 0 : index
      %13 = vector.load %arg6[%c0_11, %c0_12] : memref<8x128xf32, #tpu.memory_space<vmem>>, vector<8x128xf32>
      tpu.vector_store %arg6[%c0_11, %c0_12], %12 {strides = array<i32>} : memref<8x128xf32, #tpu.memory_space<vmem>>, vector<8x128xf32>,
    } else {
    }
    %c0 = arith.constant 0 : index
    %c0_1 = arith.constant 0 : index
    %3 = vector.load %arg6[%c0, %c0_1] : memref<8x128xf32, #tpu.memory_space<vmem>>, vector<8x128xf32>
    %c0_2 = arith.constant 0 : index
    %c0_3 = arith.constant 0 : index
    %4 = vector.load %arg3[%c0_2, %c0_3] : memref<8x128xf32, #tpu.memory_space<vmem>>, vector<8x128xf32>
    %c0_4 = arith.constant 0 : index
    %c0_5 = arith.constant 0 : index
    %5 = vector.load %arg4[%c0_4, %c0_5] : memref<128x128xf32, #tpu.memory_space<vmem>>, vector<128x128xf32>
    %cst = arith.constant dense<0.000000e+00> : vector<8x128xf32>
    %6 = tpu.matmul %4, %5, %cst {dimension_numbers = #tpu.dot_dimension_numbers<[1], [0], [0], [1], [0, 0, 1, 1], [], []>} : vector<8x128xf32>, vector<128x128xf32>, vector<8x128xf32> -> vector<8x128xf32>
    %7 = arith.addf %3, %6 : vector<8x128xf32>
    %c0_6 = arith.constant 0 : index
    %c0_7 = arith.constant 0 : index
    %8 = vector.load %arg6[%c0_6, %c0_7] : memref<8x128xf32, #tpu.memory_space<vmem>>, vector<8x128xf32>
    tpu.vector_store %arg6[%c0_6, %c0_7], %7 {strides = array<i32>} : memref<8x128xf32, #tpu.memory_space<vmem>>, vector<8x128xf32>,
    %c0_i32_8 = arith.constant 0 : i32
    %9 = arith.cmpi eq, %arg2, %c0_i32_8 : i32
    %10 = arith.extui %9 : i1 to i32
    %c0_i32_9 = arith.constant 0 : i32
    %11 = arith.cmpi ne, %10, %c0_i32_9 : i32
    scf.if %11 {
      %c0_10 = arith.constant 0 : index
      %c0_11 = arith.constant 0 : index
      %12 = vector.load %arg6[%c0_10, %c0_11] : memref<8x128xf32, #tpu.memory_space<vmem>>, vector<8x128xf32>
      %c0_12 = arith.constant 0 : index
      %c0_13 = arith.constant 0 : index
      %13 = vector.load %arg5[%c0_12, %c0_13] : memref<1x128xf32, #tpu.memory_space<vmem>>, vector<1x128xf32>
      %14 = vector.broadcast %13 : vector<1x128xf32> to vector<8x128xf32>
      %15 = arith.addf %12, %14 : vector<8x128xf32>
      %c0_14 = arith.constant 0 : index
      %c0_15 = arith.constant 0 : index
      %16 = vector.load %arg6[%c0_14, %c0_15] : memref<8x128xf32, #tpu.memory_space<vmem>>, vector<8x128xf32>
      tpu.vector_store %arg6[%c0_14, %c0_15], %15 {strides = array<i32>} : memref<8x128xf32, #tpu.memory_space<vmem>>, vector<8x128xf32>,
    } else {
    }
    return
  }
  func.func @transform_0(%arg0: i32, %arg1: i32, %arg2: i32) -> (i32, i32) {
    %c0_i32 = arith.constant 0 : i32
    return %arg0, %arg2 : i32, i32
  }
  func.func @transform_1(%arg0: i32, %arg1: i32, %arg2: i32) -> (i32, i32) {
    %c0_i32 = arith.constant 0 : i32
    return %arg2, %arg1 : i32, i32
  }
  func.func @transform_2(%arg0: i32, %arg1: i32, %arg2: i32) -> (i32, i32) {
    %c0_i32 = arith.constant 0 : i32
    %c0_i32_0 = arith.constant 0 : i32
    return %c0_i32, %arg1 : i32, i32
  }
  func.func @transform_3(%arg0: i32, %arg1: i32, %arg2: i32) -> (i32, i32) {
    %c0_i32 = arith.constant 0 : i32
    return %arg0, %arg1 : i32, i32
  }
}

</mosaic_0001>

<llo_original>
// kernel: tpu_custom_call.1
$region0: #{tpu_custom_call.1}
  #allocation0 [shape = 'u32[]', space=smem, size = 0x4, offset = 0x4, fixed_abs, tag = 'smem constant byte address 0x4 - core index']
  #allocation1 [shape = 'u32[144,128]{1,0:T(1,128)}', space=vmem, size = 0x12000, scoped, tag = 'internal scratch']
  %s0 = inlined_call_operand.hbm [shape: f32[8,128], index: 0, kind: input, shape index: {}]
  %s1 = inlined_call_operand.hbm [shape: f32[128,128], index: 1, kind: input, shape index: {}]
  %s2 = inlined_call_operand.vmem [shape: f32[1,128], index: 2, kind: input, shape index: {}]
  %s3 = inlined_call_operand.hbm [shape: f32[8,128], index: 3, kind: output, shape index: {}]
  %s4 = sld [smem:[#allocation0]]
  $region38: #{tpu_custom_call.1} parent=0
    _
  %s6 = ssub.s32 1, %s4
  %s7 = scalar_select 0, %s6, %s4
  $region1: #{tpu_custom_call.1} parent=0
    #allocation2 [shape = 'u8[4096]{0}', space=vmem, size = 0x1000, scoped, tag = 'input window, operand 0, single buffered']
    #allocation3 [shape = 's32[1]{0}', space=sflag, size = 0x4, scoped, tag = 'scoped memory for tpu_custom_call.1']
    #allocation4 [shape = 's32[1]{0}', space=sflag, size = 0x4, scoped, tag = 'scoped memory for tpu_custom_call.1']
    #allocation5 [shape = 'u8[65536]{0}', space=vmem, size = 0x10000, scoped, tag = 'input window, operand 1, single buffered']
    #allocation6 [shape = 's32[1]{0}', space=sflag, size = 0x4, scoped, tag = 'scoped memory for tpu_custom_call.1']
    #allocation7 [shape = 'u8[4096]{0}', space=vmem, size = 0x1000, scoped, tag = 'output window, operand 0, single buffered']
    %8 = vsyncpa [#allocation3], 0
    %9 = vsyncpa [#allocation6], 0
    %10 = vsyncpa [#allocation4], 0
    // Predicated region
    $region2: #{tpu_custom_call.1} parent=1 // pred_check
      _
    $region3: #{tpu_custom_call.1} parent=1 // pred_check_branch
      %12 = sbr.rel (0) target = $region5
    $region4: #{tpu_custom_call.1} parent=1 // pred_region
      %s14 = ssub.s32 128, 128
      %15 = vsyncadd [#allocation3], %s14
      %s17 = sshll.u32 [#allocation2], 4
      %s18 = int_to_ptr.vmem [resolvable:$true] %s17
      %20 = dma.hbm_to_vmem [thread:$0]  %s0, 128, %s18, [#allocation3]
    $region5: #{tpu_custom_call.1} parent=1 // pred_fallthru
      _
    // Predicated region
    $region6: #{tpu_custom_call.1} parent=1 // pred_check
      _
    $region7: #{tpu_custom_call.1} parent=1 // pred_check_branch
      %22 = sbr.rel (0) target = $region9
    $region8: #{tpu_custom_call.1} parent=1 // pred_region
      %s24 = ssub.s32 2048, 2048
      %25 = vsyncadd [#allocation6], %s24
      %s26 = sshll.u32 [#allocation5], 4
      %s27 = int_to_ptr.vmem [resolvable:$true] %s26
      %32 = dma.hbm_to_vmem [thread:$0]  %s1, 2048, %s27, [#allocation6], 128, 128, 8
    $region9: #{tpu_custom_call.1} parent=1 // pred_fallthru
      _
    // Predicated region
    $region10: #{tpu_custom_call.1} parent=1 // pred_check
      _
    $region11: #{tpu_custom_call.1} parent=1 // pred_check_branch
      %34 = sbr.rel (0) target = $region13
    $region12: #{tpu_custom_call.1} parent=1 // pred_region
      _
    $region13: #{tpu_custom_call.1} parent=1 // pred_fallthru
      _
    // Predicated region
    $region14: #{tpu_custom_call.1} parent=1 // pred_check
      _
    $region15: #{tpu_custom_call.1} parent=1 // pred_check_branch
      %36 = sbr.rel (0) target = $region17
    $region16: #{tpu_custom_call.1} parent=1 // pred_region
      %37 = dma.done [#allocation3], 128
    $region17: #{tpu_custom_call.1} parent=1 // pred_fallthru
      _
    // Predicated region
    $region18: #{tpu_custom_call.1} parent=1 // pred_check
      _
    $region19: #{tpu_custom_call.1} parent=1 // pred_check_branch
      %39 = sbr.rel (0) target = $region21
    $region20: #{tpu_custom_call.1} parent=1 // pred_region
      %40 = dma.done [#allocation6], 2048
    $region21: #{tpu_custom_call.1} parent=1 // pred_fallthru
      _
    %p41 = scmp.eq.s32.totalorder 0, 0
    // Predicated region
    $region22: #{tpu_custom_call.1} parent=1 // pred_check
      %p42 = pneg %p41
    $region23: #{tpu_custom_call.1} parent=1 // pred_check_branch
      %44 = sbr.rel (%p42) target = $region25
    $region24: #{tpu_custom_call.1} parent=1 // pred_region
      %45 = vst [vmem:[#allocation7] sm:$0xff] 0.0
    $region25: #{tpu_custom_call.1} parent=1 // pred_fallthru
      _
    %v46 = vld [vmem:[#allocation7] sm:$0xff]
    %v47 = vld [vmem:[#allocation2] sm:$0xff]
    %v48 = vld [vmem:[#allocation5] sm:$0xff]
    %v49 = vld [vmem:[#allocation5 + $0x8] sm:$0xff]
    %v50 = vld [vmem:[#allocation5 + $0x10] sm:$0xff]
    %v51 = vld [vmem:[#allocation5 + $0x18] sm:$0xff]
    %v52 = vld [vmem:[#allocation5 + $0x20] sm:$0xff]
    %v53 = vld [vmem:[#allocation5 + $0x28] sm:$0xff]
    %v54 = vld [vmem:[#allocation5 + $0x30] sm:$0xff]
    %v55 = vld [vmem:[#allocation5 + $0x38] sm:$0xff]
    %v56 = vld [vmem:[#allocation5 + $0x40] sm:$0xff]
    %v57 = vld [vmem:[#allocation5 + $0x48] sm:$0xff]
    %v58 = vld [vmem:[#allocation5 + $0x50] sm:$0xff]
    %v59 = vld [vmem:[#allocation5 + $0x58] sm:$0xff]
    %v60 = vld [vmem:[#allocation5 + $0x60] sm:$0xff]
    %v61 = vld [vmem:[#allocation5 + $0x68] sm:$0xff]
    %v62 = vld [vmem:[#allocation5 + $0x70] sm:$0xff]
    %v63 = vld [vmem:[#allocation5 + $0x78] sm:$0xff]
    %64 = vmatprep.subr.mxu0 0.0
    %65 = vmatpush1.msra.mxu0 %v48
    %66 = vmatprep.subr.mxu0 0.0
    %67 = vmatpush1.msra.mxu0 %v49
    %68 = vmatprep.subr.mxu0 0.0
    %69 = vmatpush1.msra.mxu0 %v50
    %70 = vmatprep.subr.mxu0 0.0
    %71 = vmatpush1.msra.mxu0 %v51
    %72 = vmatprep.subr.mxu0 0.0
    %73 = vmatpush1.msra.mxu0 %v52
    %74 = vmatprep.subr.mxu0 0.0
    %75 = vmatpush1.msra.mxu0 %v53
    %76 = vmatprep.subr.mxu0 0.0
    %77 = vmatpush1.msra.mxu0 %v54
    %78 = vmatprep.subr.mxu0 0.0
    %79 = vmatpush1.msra.mxu0 %v55
    %80 = vmatprep.subr.mxu0 0.0
    %81 = vmatpush1.msra.mxu0 %v56
    %82 = vmatprep.subr.mxu0 0.0
    %83 = vmatpush1.msra.mxu0 %v57
    %84 = vmatprep.subr.mxu0 0.0
    %85 = vmatpush1.msra.mxu0 %v58
    %86 = vmatprep.subr.mxu0 0.0
    %87 = vmatpush1.msra.mxu0 %v59
    %88 = vmatprep.subr.mxu0 0.0
    %89 = vmatpush1.msra.mxu0 %v60
    %90 = vmatprep.subr.mxu0 0.0
    %91 = vmatpush1.msra.mxu0 %v61
    %92 = vmatprep.subr.mxu0 0.0
    %93 = vmatpush1.msra.mxu0 %v62
    %94 = vmatprep.subr.mxu0 0.0
    %95 = vmatpush1.msra.mxu0 %v63
    %96 = vmatprep.subr.mxu0 0.0
    %97 = vmatpush1.msra.mxu0 0.0
    %98 = vmatprep.subr.mxu0 0.0
    %99 = vmatpush1.msra.mxu0 0.0
    %100 = vmatprep.subr.mxu0 0.0
    %101 = vmatpush1.msra.mxu0 0.0
    %102 = vmatprep.subr.mxu0 0.0
    %103 = vmatpush1.msra.mxu0 0.0
    %104 = vmatprep.subr.mxu0 0.0
    %105 = vmatpush1.msra.mxu0 0.0
    %106 = vmatprep.subr.mxu0 0.0
    %107 = vmatpush1.msra.mxu0 0.0
    %108 = vmatprep.subr.mxu0 0.0
    %109 = vmatpush1.msra.mxu0 0.0
    %110 = vmatprep.subr.mxu0 0.0
    %111 = vmatpush1.msra.mxu0 0.0
    %112 = vmatprep.subr.mxu0 0.0
    %113 = vmatpush1.msra.mxu0 0.0
    %114 = vmatprep.subr.mxu0 0.0
    %115 = vmatpush1.msra.mxu0 0.0
    %116 = vmatprep.subr.mxu0 0.0
    %117 = vmatpush1.msra.mxu0 0.0
    %118 = vmatprep.subr.mxu0 0.0
    %119 = vmatpush1.msra.mxu0 0.0
    %120 = vmatprep.subr.mxu0 0.0
    %121 = vmatpush1.msra.mxu0 0.0
    %122 = vmatprep.subr.mxu0 0.0
    %123 = vmatpush1.msra.mxu0 0.0
    %124 = vmatprep.subr.mxu0 0.0
    %125 = vmatpush1.msra.mxu0 0.0
    %126 = vmatprep.subr.mxu0 0.0
    %127 = vmatpush1.msra.mxu0 0.0
    %128 = vmatprep.mubr.f32.mxu0 0.0
    %129 = vmatmul.mubr.f32.gmra.mrb[0].mxu0 %v47
    %v130 = vpop.f32.mrb[0].mxu0
    %v131 = vadd.f32 0.0, %v130
    %v132 = vpop.f32.mrb[0].mxu0
    %133 = vdwg.mxu0
    %v134 = vadd.f32 %v46, %v131
    %135 = vst [vmem:[#allocation7] sm:$0xff] %v134
    // Predicated region
    $region26: #{tpu_custom_call.1} parent=1 // pred_check
      %p136 = pneg %p41
    $region27: #{tpu_custom_call.1} parent=1 // pred_check_branch
      %138 = sbr.rel (%p136) target = $region29
    $region28: #{tpu_custom_call.1} parent=1 // pred_region
      %v139 = vld [vmem:[#allocation7] sm:$0xff]
      %v140 = vld [vmem:[%s2] sm:$0x1]
      %v142 = vlaneseq
      %v143 = vshrl.u32 %v142, 7
      %v144 = vsub.s32 0, %v143
      %v145 = vrot.slane %v140, %v144
      %v147 = vadd.f32 %v139, %v145
      %148 = vst [vmem:[#allocation7] sm:$0xff] %v147
    $region29: #{tpu_custom_call.1} parent=1 // pred_fallthru
      _
    // Predicated region
    $region30: #{tpu_custom_call.1} parent=1 // pred_check
      _
    $region31: #{tpu_custom_call.1} parent=1 // pred_check_branch
      %150 = sbr.rel (0) target = $region33
    $region32: #{tpu_custom_call.1} parent=1 // pred_region
      %s152 = ssub.s32 128, 128
      %153 = vsyncadd [#allocation4], %s152
      %s155 = sshll.u32 [#allocation7], 4
      %s156 = int_to_ptr.vmem [resolvable:$true] %s155
      %158 = dma.vmem_to_hbm [thread:$0]  %s156, 128, %s3, [#allocation4]
    $region33: #{tpu_custom_call.1} parent=1 // pred_fallthru
      _
    // Predicated region
    $region34: #{tpu_custom_call.1} parent=1 // pred_check
      _
    $region35: #{tpu_custom_call.1} parent=1 // pred_check_branch
      %160 = sbr.rel (0) target = $region37
    $region36: #{tpu_custom_call.1} parent=1 // pred_region
      %161 = dma.done [#allocation4], 128
    $region37: #{tpu_custom_call.1} parent=1 // pred_fallthru
      _
    %162 = vsyncpa [#allocation3], 1
    %163 = vsyncpa [#allocation6], 1
    %164 = vsyncpa [#allocation4], 1

</llo_original>
